<compile_context>
chip_gen: v7x
topology: tpu7x:2x2x1
jax: 0.10.0
libtpu: 0.0.40
codegen_flags: <defaults>
</compile_context>

<pallas_src>
import functools

import jax
import jax.numpy as jnp
from jax.experimental import pallas as pl
from jax.experimental.pallas import tpu as pltpu


def mlp_kernel(xT_ref, params_ref, o_ref):
    # xT_ref:     (1, NP)   batch on the lane axis, zero-padded to a multiple of 128
    # params_ref: (H, 4)    columns: [w1, b1, w2, b2(row 0)]  -- single VMEM operand
    # o_ref:      (1, NP)   lane-dense output
    xT = xT_ref[...]                           # (1, NP)
    w1 = params_ref[:, 0:1]                    # (H, 1)
    b1 = params_ref[:, 1:2]                    # (H, 1)
    w2 = params_ref[:, 2:3]                    # (H, 1)
    b2 = params_ref[0:1, 3:4]                  # (1, 1)

    # hidden layer: outer-product broadcast on the VPU (no MXU), then ReLU
    h = jnp.maximum(w1 * xT + b1, 0.0)         # (H, NP)
    # output layer: elementwise multiply + cross-sublane reduce (XLU) + bias
    y = jnp.sum(h * w2, axis=0, keepdims=True) + b2   # (1, NP)

    o_ref[...] = y.astype(o_ref.dtype)


def pack_params(w1, b1, w2, b2):
    """Pack all parameters into a single (H, 4) f32 operand.

    w1: (1, H); b1: (1, H); w2: (H, 1); b2: (1, 1)   (torch weights transposed
    to (in_features, out_features)).  Done ONCE at init -- not on the call path.
    """
    n_hidden = w1.shape[1]
    b2_col = jnp.zeros((n_hidden, 1), jnp.float32).at[0, 0].set(b2.reshape(()))
    return jnp.concatenate([w1.T, b1.T, w2, b2_col], axis=1)   # (H, 4)


@jax.jit
def net_forward(x, params):
    """x: (N, 1) f32; params: (H, 4) packed via pack_params. Returns (N, 1)."""
    n = x.shape[0]
    n_hidden = params.shape[0]

    # Pad the batch to a lane multiple (128): exact (8,128) vregs, unmasked stores.
    NP = ((n + 127) // 128) * 128
    xT = jnp.pad(x.T, ((0, 0), (0, NP - n)))                    # (1, NP)

    full = lambda shape: pl.BlockSpec(shape, lambda: tuple(0 for _ in shape))

    cost = pl.CostEstimate(
        flops=4 * n * n_hidden,
        transcendentals=0,
        bytes_accessed=4 * (NP + params.size + NP),
    )

    yT = pl.pallas_call(
        mlp_kernel,
        out_shape=jax.ShapeDtypeStruct((1, NP), x.dtype),
        grid=(),  # tiny problem: single block resident in VMEM; add a parallel
                  # batch grid axis (lane-dense (1, TN) blocks, TN >= 2048) only
                  # if N ever scales enough to use both v7x TensorCores.
        in_specs=[
            full((1, NP)),
            full((n_hidden, 4)),
        ],
        out_specs=full((1, NP)),
        cost_estimate=cost,
    )(xT, params)

    # Padded lanes carry relu(b1)*w2 + b2 garbage -- sliced off here.
    return yT[:, :n].T                                          # (N, 1)


def init_params(key, n_feature, n_hidden, n_output):
    """Deterministic init mimicking torch.nn.Linear (uniform +/- 1/sqrt(fan_in)).
    Stored as (in_features, out_features) == torch weight transposed."""
    k1, k2, k3, k4 = jax.random.split(key, 4)
    bound1 = 1.0 / jnp.sqrt(jnp.float32(n_feature))
    bound2 = 1.0 / jnp.sqrt(jnp.float32(n_hidden))
    w1 = jax.random.uniform(k1, (n_feature, n_hidden), jnp.float32, -bound1, bound1)
    b1 = jax.random.uniform(k2, (1, n_hidden), jnp.float32, -bound1, bound1)
    w2 = jax.random.uniform(k3, (n_hidden, n_output), jnp.float32, -bound2, bound2)
    b2 = jax.random.uniform(k4, (1, n_output), jnp.float32, -bound2, bound2)
    return w1, b1, w2, b2


if __name__ == "__main__":
    # Shapes implied by the original script: x = linspace(-1, 1, 100)[:, None]
    N, n_feature, n_hidden, n_output = 100, 1, 32, 1
    assert n_feature == 1 and n_output == 1, "kernel specialized to scalar in/out features"

    key = jax.random.PRNGKey(0)
    x = jnp.expand_dims(jnp.linspace(-1.0, 1.0, N, dtype=jnp.float32), axis=1)
    w1, b1, w2, b2 = init_params(key, n_feature, n_hidden, n_output)

    # Pack once at init (inference-constant weights) -- off the per-call path.
    params = pack_params(w1, b1, w2, b2)
    jax.block_until_ready(params)

    out = net_forward(x, params)
    jax.block_until_ready(out)

    # Pure-JAX reference check (all f32).
    ref = jnp.maximum(x @ w1 + b1, 0.0) @ w2 + b2
    assert out.shape == (N, n_output)
    assert jnp.allclose(out, ref, atol=1e-5, rtol=1e-5)

    print("KERNEL_OK")
</pallas_src>

<mosaic_0001>
module attributes {stable_mosaic.version = 11 : i64} {
  func.func @mlp_kernel(%arg0: memref<1x128xf32, #tpu.memory_space<vmem>>, %arg1: memref<32x4xf32, #tpu.memory_space<vmem>>, %arg2: memref<1x128xf32, #tpu.memory_space<vmem>>) attributes {dimension_semantics = [], scalar_prefetch = 0 : i64, scratch_operands = 0 : i64, tpu.core_type = #tpu.core_type<tc>} {
    %c0 = arith.constant 0 : index
    %c0_0 = arith.constant 0 : index
    %0 = vector.load %arg0[%c0, %c0_0] : memref<1x128xf32, #tpu.memory_space<vmem>>, vector<1x128xf32>
    %c0_1 = arith.constant 0 : index
    %c0_2 = arith.constant 0 : index
    %1 = vector.load %arg1[%c0_1, %c0_2] : memref<32x4xf32, #tpu.memory_space<vmem>>, vector<32x1xf32>
    %c0_3 = arith.constant 0 : index
    %c1 = arith.constant 1 : index
    %2 = vector.load %arg1[%c0_3, %c1] : memref<32x4xf32, #tpu.memory_space<vmem>>, vector<32x1xf32>
    %c0_4 = arith.constant 0 : index
    %c2 = arith.constant 2 : index
    %3 = vector.load %arg1[%c0_4, %c2] : memref<32x4xf32, #tpu.memory_space<vmem>>, vector<32x1xf32>
    %c0_5 = arith.constant 0 : index
    %c3 = arith.constant 3 : index
    %4 = vector.load %arg1[%c0_5, %c3] : memref<32x4xf32, #tpu.memory_space<vmem>>, vector<1x1xf32>
    %5 = vector.broadcast %1 : vector<32x1xf32> to vector<32x128xf32>
    %6 = vector.broadcast %0 : vector<1x128xf32> to vector<32x128xf32>
    %7 = arith.mulf %5, %6 : vector<32x128xf32>
    %8 = vector.broadcast %2 : vector<32x1xf32> to vector<32x128xf32>
    %9 = arith.addf %7, %8 : vector<32x128xf32>
    %cst = arith.constant 0.000000e+00 : f32
    %10 = vector.broadcast %cst : f32 to vector<32x128xf32>
    %11 = arith.maximumf %9, %10 : vector<32x128xf32>
    %12 = vector.broadcast %3 : vector<32x1xf32> to vector<32x128xf32>
    %13 = arith.mulf %11, %12 : vector<32x128xf32>
    %cst_6 = arith.constant dense<0.000000e+00> : vector<128xf32>
    %14 = vector.multi_reduction <add>, %13, %cst_6 [0] : vector<32x128xf32> to vector<128xf32>
    %15 = vector.shape_cast %14 : vector<128xf32> to vector<1x128xf32>
    %16 = vector.broadcast %4 : vector<1x1xf32> to vector<1x128xf32>
    %17 = arith.addf %15, %16 : vector<1x128xf32>
    %c0_7 = arith.constant 0 : index
    %c0_8 = arith.constant 0 : index
    %18 = vector.load %arg2[%c0_7, %c0_8] : memref<1x128xf32, #tpu.memory_space<vmem>>, vector<1x128xf32>
    tpu.vector_store %arg2[%c0_7, %c0_8], %17 {strides = array<i32>} : memref<1x128xf32, #tpu.memory_space<vmem>>, vector<1x128xf32>,
    return
  }
}

</mosaic_0001>

<llo_original>
// kernel: net_forward.1
$region0: #{net_forward.1}
  #allocation0 [shape = 'u32[]', space=smem, size = 0x4, offset = 0x4, fixed_abs, tag = 'smem constant byte address 0x4 - core index']
  #allocation1 [shape = 'u32[144,128]{1,0:T(1,128)}', space=vmem, size = 0x12000, scoped, tag = 'internal scratch']
  %s0 = inlined_call_operand.vmem [shape: f32[1,128], index: 0, kind: input, shape index: {}]
  %s1 = inlined_call_operand.vmem [shape: f32[32,4], index: 1, kind: input, shape index: {}]
  %s2 = inlined_call_operand.vmem [shape: f32[1,128], index: 2, kind: output, shape index: {}]
  %s3 = sld [smem:[#allocation0]]
  $region18: #{net_forward.1} parent=0
    _
  %s5 = ssub.s32 1, %s3
  %s6 = scalar_select 0, %s5, %s3
  // Predicated region
  $region2: #{net_forward.1} parent=0 // pred_check
    _
  $region3: #{net_forward.1} parent=0 // pred_check_branch
    %8 = sbr.rel (0) target = $region5
  $region4: #{net_forward.1} parent=0 // pred_region
    _
  $region5: #{net_forward.1} parent=0 // pred_fallthru
    _
  // Predicated region
  $region6: #{net_forward.1} parent=0 // pred_check
    _
  $region7: #{net_forward.1} parent=0 // pred_check_branch
    %10 = sbr.rel (0) target = $region9
  $region8: #{net_forward.1} parent=0 // pred_region
    _
  $region9: #{net_forward.1} parent=0 // pred_fallthru
    _
  %v11 = vld [vmem:[%s0] sm:$0x1]
  %v12 = vld [vmem:[%s1] sm:$0xff]
  %v13 = vld [vmem:[%s1 + $0x8] sm:$0xff]
  %v14 = vld [vmem:[%s1 + $0x10] sm:$0xff]
  %v15 = vld [vmem:[%s1 + $0x18] sm:$0xff]
  %v16 = vld [vmem:[%s1] sm:$0x1]
  %18 = vset.pattern.permute.xlu0 0
  %19 = vperm.xlu0 %18, %v12
  %v20 = vpop.permute.xlu0 %19
  %23 = vset.pattern.permute.xlu0 0
  %24 = vperm.xlu0 %23, %v13
  %v25 = vpop.permute.xlu0 %24
  %28 = vset.pattern.permute.xlu0 0
  %29 = vperm.xlu0 %28, %v14
  %v30 = vpop.permute.xlu0 %29
  %33 = vset.pattern.permute.xlu0 0
  %34 = vperm.xlu0 %33, %v15
  %v35 = vpop.permute.xlu0 %34
  %v38 = vlaneseq
  %v39 = vshrl.u32 %v38, 7
  %v40 = vsub.s32 0, %v39
  %v41 = vrot.slane %v11, %v40
  %v43 = vmul.f32 %v20, %v41
  %v44 = vmul.f32 %v25, %v41
  %v45 = vmul.f32 %v30, %v41
  %v46 = vmul.f32 %v35, %v41
  %47 = vset.pattern.permute.xlu0 1
  %48 = vperm.xlu0 %47, %v12
  %v49 = vpop.permute.xlu0 %48
  %51 = vset.pattern.permute.xlu0 1
  %52 = vperm.xlu0 %51, %v13
  %v53 = vpop.permute.xlu0 %52
  %55 = vset.pattern.permute.xlu0 1
  %56 = vperm.xlu0 %55, %v14
  %v57 = vpop.permute.xlu0 %56
  %59 = vset.pattern.permute.xlu0 1
  %60 = vperm.xlu0 %59, %v15
  %v61 = vpop.permute.xlu0 %60
  %v63 = vadd.f32 %v43, %v49
  %v64 = vadd.f32 %v44, %v53
  %v65 = vadd.f32 %v45, %v57
  %v66 = vadd.f32 %v46, %v61
  %v67 = vmax.f32 %v63, 0.0
  %v68 = vmax.f32 %v64, 0.0
  %v69 = vmax.f32 %v65, 0.0
  %v70 = vmax.f32 %v66, 0.0
  %71 = vset.pattern.permute.xlu0 2
  %72 = vperm.xlu0 %71, %v12
  %v73 = vpop.permute.xlu0 %72
  %75 = vset.pattern.permute.xlu0 2
  %76 = vperm.xlu0 %75, %v13
  %v77 = vpop.permute.xlu0 %76
  %79 = vset.pattern.permute.xlu0 2
  %80 = vperm.xlu0 %79, %v14
  %v81 = vpop.permute.xlu0 %80
  %83 = vset.pattern.permute.xlu0 2
  %84 = vperm.xlu0 %83, %v15
  %v85 = vpop.permute.xlu0 %84
  %v87 = vmul.f32 %v67, %v73
  %v88 = vmul.f32 %v68, %v77
  %v89 = vmul.f32 %v69, %v81
  %v90 = vmul.f32 %v70, %v85
  %v91 = vadd.f32 %v87, %v88
  %v92 = vadd.f32 %v91, %v89
  %v93 = vadd.f32 %v92, %v90
  %v94 = vrot.slane %v93, 4
  %v95 = vadd.f32 %v93, %v94
  %v96 = vrot.slane %v95, 2
  %v97 = vadd.f32 %v95, %v96
  %v98 = vrot.slane %v97, 1
  %v99 = vadd.f32 %v97, %v98
  %101 = vset.pattern.permute.xlu0 3
  %102 = vperm.xlu0 %101, %v16
  %v103 = vpop.permute.xlu0 %102
  %v105 = vadd.f32 %v99, %v103
  %106 = vst [vmem:[%s2] sm:$0x1] %v105
  // Predicated region
  $region10: #{net_forward.1} parent=0 // pred_check
    _
  $region11: #{net_forward.1} parent=0 // pred_check_branch
    %108 = sbr.rel (0) target = $region13
  $region12: #{net_forward.1} parent=0 // pred_region
    _
  $region13: #{net_forward.1} parent=0 // pred_fallthru
    _
  // Predicated region
  $region14: #{net_forward.1} parent=0 // pred_check
    _
  $region15: #{net_forward.1} parent=0 // pred_check_branch
    %110 = sbr.rel (0) target = $region17
  $region16: #{net_forward.1} parent=0 // pred_region
    _
  $region17: #{net_forward.1} parent=0 // pred_fallthru
    _

</llo_original>
